<compile_context>
chip_gen: v6e
topology: v6e:2x2x1
jax: 0.10.0
libtpu: 0.0.40
codegen_flags: <defaults>
</compile_context>

<pallas_src>
import math

import jax
import jax.numpy as jnp
from jax.experimental import pallas as pl
from jax.experimental.pallas import tpu as pltpu


def _attn_kernel(x_ref, mask_ref, wqkvT_ref, woT_ref, bqkv_ref, bo_ref, o_ref):
    bb, S, E = x_ref.shape
    Ep = woT_ref.shape[0]                    # lane-padded embed dim (multiple of 128)

    # ---- fused QKV projection: one (bb*S, E) @ (E, 3*Ep) bf16 MXU push, f32 acc ----
    x2d = x_ref[...].reshape(bb * S, E).astype(jnp.bfloat16)
    qkv = jnp.dot(x2d, wqkvT_ref[...], preferred_element_type=jnp.float32)
    qkv = qkv + bqkv_ref[...]                                    # (bb*S, 3*Ep) f32

    # Lane-aligned column slices (offsets are multiples of 128 -> free views).
    # Softmax scale is pre-folded into the Q weights/bias in the wrapper.
    q = qkv[:, :Ep].reshape(bb, S, Ep).astype(jnp.bfloat16)
    k = qkv[:, Ep:2 * Ep].reshape(bb, S, Ep).astype(jnp.bfloat16)
    v = qkv[:, 2 * Ep:].reshape(bb, S, Ep).astype(jnp.bfloat16)

    # ---- scores: contract last dims directly (no k.T materialized), f32 accumulate.
    # Padded lanes of q/k are zero, so they contribute nothing to the dot products.
    s = jnp.einsum('bqd,bkd->bqk', q, k, preferred_element_type=jnp.float32)

    # Key mask built in-kernel from the int8 adjacency (cheap VPU select).  Masked
    # keys get a very large negative score (acts like -inf).  NOTE: a fully-False
    # adjacency row would yield a uniform softmax over masked keys (PyTorch gives
    # NaN); the caller forces the diagonal True.
    keep = (mask_ref[...] != 0)[None, :, :]                      # (1, S, S)
    s = jnp.where(keep, s, -1e30)

    # ---- numerically stable softmax kept in f32 (v5e VPU/EUP have no bf16) ---------
    m = jnp.max(s, axis=-1, keepdims=True)
    p = jnp.exp(s - m)
    denom = jnp.sum(p, axis=-1, keepdims=True)

    # Deferred normalization: run PV on the un-normalized bf16 probabilities, then
    # rescale the attn tensor with an exact reciprocal (tight numerics, tiny cost).
    attn = jnp.einsum('bqk,bkd->bqd', p.astype(jnp.bfloat16), v,
                      preferred_element_type=jnp.float32)
    attn = attn * (1.0 / denom)

    # ---- output projection (bf16 operands, f32 accumulate); lane-dense store -------
    out = jnp.dot(attn.reshape(bb * S, Ep).astype(jnp.bfloat16), woT_ref[...],
                  preferred_element_type=jnp.float32) + bo_ref[...]
    o_ref[...] = out.reshape(bb, S, Ep).astype(o_ref.dtype)


def _round_up(n, m):
    return ((n + m - 1) // m) * m


def _pick_batch_block(B, S, E, Ep, budget_bytes=20 * 1024 * 1024):
    """Per-step batch block: fits a conservative VMEM budget (safe on v7x's 64 MiB),
    prefers >=4 grid steps for pipelining/megacore, then MXU row fill."""
    def footprint(bb):
        return (2 * bb * S * E * 4                 # x blocks (double-buffered, f32)
                + 2 * bb * S * Ep * 4              # out blocks (double-buffered, f32)
                + bb * S * 3 * Ep * 4              # qkv intermediate (f32)
                + 3 * bb * S * Ep * 2              # q/k/v bf16 copies
                + 3 * bb * S * S * 4               # scores / probs temporaries (f32)
                + 2 * bb * S * Ep * 4              # attn / out temporaries (f32)
                + 2 * (E * 3 * Ep + Ep * Ep) * 2   # bf16 weights (double-buffered)
                + 2 * 4 * (3 * Ep + Ep)            # biases
                + 2 * S * S)                       # int8 mask
    divisors = [d for d in range(1, B + 1) if B % d == 0]
    fitting = [d for d in divisors if footprint(d) <= budget_bytes] or [1]
    for min_steps, min_rows in ((4, 256), (2, 256), (2, 1), (1, 1)):
        pool = [d for d in fitting if (B // d) >= min_steps and d * S >= min_rows]
        if pool:
            return max(pool)
    return max(fitting)


def attention_model_forward(x, adj, params, n_heads=1):
    """x: (B, S, E) float32, adj: (S, S) bool. Returns (B, S, E) float32."""
    # TODO(synk): only n_heads == 1 (the module default) is implemented in-kernel.
    assert n_heads == 1, "only n_heads=1 implemented"
    B, S, E = x.shape
    in_w, in_b, out_w, out_b = params
    wq, wk, wv = in_w[:E], in_w[E:2 * E], in_w[2 * E:]
    bq, bk, bv = in_b[:E], in_b[E:2 * E], in_b[2 * E:]

    scale = 1.0 / math.sqrt(E / n_heads)
    Ep = _round_up(E, 128)                 # lane-aligned embed dim
    pad_e = Ep - E

    def padc(a):                           # zero-pad last dim E -> Ep (2-D)
        return jnp.pad(a, ((0, 0), (0, pad_e)))

    def padv(a):                           # zero-pad 1-D E -> Ep
        return jnp.pad(a, ((0, pad_e),))

    # Fused, pre-transposed QKV weight (E, 3*Ep) in bf16, softmax scale folded into Q.
    wqkv_t = jnp.concatenate([padc(wq.T * scale), padc(wk.T), padc(wv.T)],
                             axis=1).astype(jnp.bfloat16)
    bqkv = jnp.concatenate([padv(bq * scale), padv(bk), padv(bv)])[None, :]
    bqkv = bqkv.astype(jnp.float32)                                     # (1, 3*Ep)
    # Output projection padded (Ep, Ep); padded rows/cols are zero so padded attn
    # lanes contribute nothing and padded output lanes stay zero.
    wo_t = jnp.pad(out_w.T, ((0, pad_e), (0, pad_e))).astype(jnp.bfloat16)
    bo = padv(out_b)[None, :].astype(jnp.float32)                       # (1, Ep)

    # int8 adjacency; the key mask is built in-kernel (no (S,S) f32 bias through HBM).
    mask = adj.astype(jnp.int8)

    bb = _pick_batch_block(B, S, E, Ep)
    grid = (B // bb,)

    flops = 2 * B * S * (E * 3 * Ep + S * Ep + S * Ep + Ep * Ep)
    bytes_accessed = (B * S * E * 4 + B * S * Ep * 4 + S * S
                      + (E * 3 * Ep + Ep * Ep) * 2 + (3 * Ep + Ep) * 4)

    out = pl.pallas_call(
        _attn_kernel,
        out_shape=jax.ShapeDtypeStruct((B, S, Ep), x.dtype),
        grid=grid,
        in_specs=[
            pl.BlockSpec((bb, S, E), lambda b: (b, 0, 0)),       # x (batch tile)
            pl.BlockSpec((S, S), lambda b: (0, 0)),              # adjacency (int8)
            pl.BlockSpec((E, 3 * Ep), lambda b: (0, 0)),         # fused Wqkv^T (bf16)
            pl.BlockSpec((Ep, Ep), lambda b: (0, 0)),            # Wo^T (bf16)
            pl.BlockSpec((1, 3 * Ep), lambda b: (0, 0)),         # fused bqkv (f32)
            pl.BlockSpec((1, Ep), lambda b: (0, 0)),             # bo (f32)
        ],
        out_specs=pl.BlockSpec((bb, S, Ep), lambda b: (b, 0, 0)),
        compiler_params=pltpu.CompilerParams(
            dimension_semantics=("parallel",),
            vmem_limit_bytes=32 * 1024 * 1024,
        ),
        cost_estimate=pl.CostEstimate(
            flops=int(flops),
            transcendentals=int(B * S * S),
            bytes_accessed=int(bytes_accessed),
        ),
    )(x, mask, wqkv_t, wo_t, bqkv, bo)

    return out if pad_e == 0 else out[..., :E]


def _reference(x, adj, params):
    """Pure-JAX reference of the same math (single-head MHA + key padding mask)."""
    in_w, in_b, out_w, out_b = params
    B, S, E = x.shape
    wq, wk, wv = in_w[:E], in_w[E:2 * E], in_w[2 * E:]
    bq, bk, bv = in_b[:E], in_b[E:2 * E], in_b[2 * E:]
    q = x @ wq.T + bq
    k = x @ wk.T + bk
    v = x @ wv.T + bv
    scores = (q / jnp.sqrt(jnp.float32(E))) @ jnp.swapaxes(k, -1, -2)   # (B, S, S)
    scores = jnp.where(adj[None], scores, -jnp.inf)
    p = jax.nn.softmax(scores, axis=-1)
    attn = p @ v
    return attn @ out_w.T + out_b


if __name__ == "__main__":
    key = jax.random.PRNGKey(0)
    B, S, E = 2, 8, 32
    k1, k2, k3, k4, k5 = jax.random.split(key, 5)

    # input: (batch, seq, embed), matching the module's expected x before its permute
    x = jax.random.normal(k1, (B, S, E), dtype=jnp.float32)

    # deterministic synthetic parameters (shapes from nn.MultiheadAttention(E, 1))
    in_proj_w = jax.random.normal(k2, (3 * E, E), dtype=jnp.float32) * 0.1
    in_proj_b = jax.random.normal(k3, (3 * E,), dtype=jnp.float32) * 0.1
    out_proj_w = jax.random.normal(k4, (E, E), dtype=jnp.float32) * 0.1
    out_proj_b = jax.random.normal(k5, (E,), dtype=jnp.float32) * 0.1
    params = (in_proj_w, in_proj_b, out_proj_w, out_proj_b)

    # adjacency (S, S) bool; diagonal forced True so no query row is fully masked
    adj = jax.random.bernoulli(jax.random.PRNGKey(1), 0.6, (S, S))
    adj = adj | jnp.eye(S, dtype=bool)

    out = attention_model_forward(x, adj, params)
    out = jax.block_until_ready(out)

    ref = _reference(x, adj, params)
    assert out.shape == (B, S, E)
    # Tolerance accounts for bf16 MXU operands (everything accumulates in f32 and the
    # softmax / normalization path is exact f32).
    assert jnp.allclose(out, ref, atol=2e-2, rtol=2e-2), "mismatch vs reference"
    print("KERNEL_OK")
</pallas_src>

<mosaic_0001>
module attributes {stable_mosaic.version = 11 : i64} {
  func.func @_attn_kernel(%arg0: i32, %arg1: memref<1x8x32xf32, #tpu.memory_space<vmem>>, %arg2: memref<8x8xi8, #tpu.memory_space<vmem>>, %arg3: memref<32x384xbf16, #tpu.memory_space<vmem>>, %arg4: memref<128x128xbf16, #tpu.memory_space<vmem>>, %arg5: memref<1x384xf32, #tpu.memory_space<vmem>>, %arg6: memref<1x128xf32, #tpu.memory_space<vmem>>, %arg7: memref<1x8x128xf32, #tpu.memory_space<vmem>>) attributes {dimension_semantics = [#tpu.dimension_semantics<parallel>], iteration_bounds = array<i64: 2>, scalar_prefetch = 0 : i64, scratch_operands = 0 : i64, tpu.core_type = #tpu.core_type<tc>, window_params = [{transform_indices = @transform_0, window_bounds = array<i64: 1, 8, 32>}, {pipeline_mode = #tpu.pipeline_mode<synchronous>, transform_indices = @transform_1, window_bounds = array<i64: 8, 8>}, {pipeline_mode = #tpu.pipeline_mode<synchronous>, transform_indices = @transform_2, window_bounds = array<i64: 32, 384>}, {pipeline_mode = #tpu.pipeline_mode<synchronous>, transform_indices = @transform_3, window_bounds = array<i64: 128, 128>}, {pipeline_mode = #tpu.pipeline_mode<synchronous>, transform_indices = @transform_4, window_bounds = array<i64: 1, 384>}, {pipeline_mode = #tpu.pipeline_mode<synchronous>, transform_indices = @transform_5, window_bounds = array<i64: 1, 128>}, {transform_indices = @transform_6, window_bounds = array<i64: 1, 8, 128>}]} {
    %c0 = arith.constant 0 : index
    %c0_0 = arith.constant 0 : index
    %c0_1 = arith.constant 0 : index
    %0 = vector.load %arg1[%c0, %c0_0, %c0_1] : memref<1x8x32xf32, #tpu.memory_space<vmem>>, vector<1x8x32xf32>
    %1 = vector.shape_cast %0 : vector<1x8x32xf32> to vector<8x32xf32>
    %2 = arith.truncf %1 : vector<8x32xf32> to vector<8x32xbf16>
    %c0_2 = arith.constant 0 : index
    %c0_3 = arith.constant 0 : index
    %3 = vector.load %arg3[%c0_2, %c0_3] : memref<32x384xbf16, #tpu.memory_space<vmem>>, vector<32x384xbf16>
    %cst = arith.constant dense<0.000000e+00> : vector<8x384xf32>
    %4 = tpu.matmul %2, %3, %cst {dimension_numbers = #tpu.dot_dimension_numbers<[1], [0], [0], [1], [0, 0, 1, 1], [], []>} : vector<8x32xbf16>, vector<32x384xbf16>, vector<8x384xf32> -> vector<8x384xf32>
    %c0_4 = arith.constant 0 : index
    %c0_5 = arith.constant 0 : index
    %5 = vector.load %arg5[%c0_4, %c0_5] : memref<1x384xf32, #tpu.memory_space<vmem>>, vector<1x384xf32>
    %6 = vector.broadcast %5 : vector<1x384xf32> to vector<8x384xf32>
    %7 = arith.addf %4, %6 : vector<8x384xf32>
    %8 = vector.extract_strided_slice %7 {offsets = [0, 0], sizes = [8, 128], strides = [1, 1]} : vector<8x384xf32> to vector<8x128xf32>
    %9 = vector.shape_cast %8 : vector<8x128xf32> to vector<1x8x128xf32>
    %10 = arith.truncf %9 : vector<1x8x128xf32> to vector<1x8x128xbf16>
    %11 = vector.extract_strided_slice %7 {offsets = [0, 128], sizes = [8, 128], strides = [1, 1]} : vector<8x384xf32> to vector<8x128xf32>
    %12 = vector.shape_cast %11 : vector<8x128xf32> to vector<1x8x128xf32>
    %13 = arith.truncf %12 : vector<1x8x128xf32> to vector<1x8x128xbf16>
    %14 = vector.extract_strided_slice %7 {offsets = [0, 256], sizes = [8, 128], strides = [1, 1]} : vector<8x384xf32> to vector<8x128xf32>
    %15 = vector.shape_cast %14 : vector<8x128xf32> to vector<1x8x128xf32>
    %16 = arith.truncf %15 : vector<1x8x128xf32> to vector<1x8x128xbf16>
    "tpu.trace_start"() <{level = 10 : i32, message = "bqd,bkd->bqk"}> : () -> ()
    %cst_6 = arith.constant dense<0.000000e+00> : vector<1x8x8xf32>
    %17 = tpu.matmul %10, %13, %cst_6 {dimension_numbers = #tpu.dot_dimension_numbers<[2], [2], [1], [1], [0, 0, 0, 1, 1, 1], [0], [0]>} : vector<1x8x128xbf16>, vector<1x8x128xbf16>, vector<1x8x8xf32> -> vector<1x8x8xf32>
    "tpu.trace_stop"() : () -> ()
    %c0_7 = arith.constant 0 : index
    %c0_8 = arith.constant 0 : index
    %18 = vector.load %arg2[%c0_7, %c0_8] : memref<8x8xi8, #tpu.memory_space<vmem>>, vector<8x8xi8>
    %c0_i8 = arith.constant 0 : i8
    %19 = vector.broadcast %c0_i8 : i8 to vector<8x8xi8>
    %20 = arith.cmpi ne, %18, %19 : vector<8x8xi8>
    %21 = vector.shape_cast %20 : vector<8x8xi1> to vector<1x8x8xi1>
    %cst_9 = arith.constant -1.000000e+30 : f32
    %22 = vector.broadcast %cst_9 : f32 to vector<1x8x8xf32>
    %23 = arith.select %21, %17, %22 : vector<1x8x8xi1>, vector<1x8x8xf32>
    %cst_10 = arith.constant dense<0xFF800000> : vector<1x8xf32>
    %24 = vector.multi_reduction <maximumf>, %23, %cst_10 [2] : vector<1x8x8xf32> to vector<1x8xf32>
    %25 = vector.shape_cast %24 : vector<1x8xf32> to vector<1x8x1xf32>
    %26 = vector.broadcast %25 : vector<1x8x1xf32> to vector<1x8x8xf32>
    %27 = arith.subf %23, %26 : vector<1x8x8xf32>
    %28 = math.exp %27 : vector<1x8x8xf32>
    %cst_11 = arith.constant dense<0.000000e+00> : vector<1x8xf32>
    %29 = vector.multi_reduction <add>, %28, %cst_11 [2] : vector<1x8x8xf32> to vector<1x8xf32>
    %30 = vector.shape_cast %29 : vector<1x8xf32> to vector<1x8x1xf32>
    %31 = arith.truncf %28 : vector<1x8x8xf32> to vector<1x8x8xbf16>
    "tpu.trace_start"() <{level = 10 : i32, message = "bqk,bkd->bqd"}> : () -> ()
    %cst_12 = arith.constant dense<0.000000e+00> : vector<1x8x128xf32>
    %32 = tpu.matmul %31, %16, %cst_12 {dimension_numbers = #tpu.dot_dimension_numbers<[2], [1], [1], [2], [0, 0, 0, 1, 1, 2], [0], [0]>} : vector<1x8x8xbf16>, vector<1x8x128xbf16>, vector<1x8x128xf32> -> vector<1x8x128xf32>
    "tpu.trace_stop"() : () -> ()
    %cst_13 = arith.constant 1.000000e+00 : f32
    %33 = vector.broadcast %cst_13 : f32 to vector<1x8x1xf32>
    %34 = arith.divf %33, %30 : vector<1x8x1xf32>
    %35 = vector.broadcast %34 : vector<1x8x1xf32> to vector<1x8x128xf32>
    %36 = arith.mulf %32, %35 : vector<1x8x128xf32>
    %37 = vector.shape_cast %36 : vector<1x8x128xf32> to vector<8x128xf32>
    %38 = arith.truncf %37 : vector<8x128xf32> to vector<8x128xbf16>
    %c0_14 = arith.constant 0 : index
    %c0_15 = arith.constant 0 : index
    %39 = vector.load %arg4[%c0_14, %c0_15] : memref<128x128xbf16, #tpu.memory_space<vmem>>, vector<128x128xbf16>
    %cst_16 = arith.constant dense<0.000000e+00> : vector<8x128xf32>
    %40 = tpu.matmul %38, %39, %cst_16 {dimension_numbers = #tpu.dot_dimension_numbers<[1], [0], [0], [1], [0, 0, 1, 1], [], []>} : vector<8x128xbf16>, vector<128x128xbf16>, vector<8x128xf32> -> vector<8x128xf32>
    %c0_17 = arith.constant 0 : index
    %c0_18 = arith.constant 0 : index
    %41 = vector.load %arg6[%c0_17, %c0_18] : memref<1x128xf32, #tpu.memory_space<vmem>>, vector<1x128xf32>
    %42 = vector.broadcast %41 : vector<1x128xf32> to vector<8x128xf32>
    %43 = arith.addf %40, %42 : vector<8x128xf32>
    %44 = vector.shape_cast %43 : vector<8x128xf32> to vector<1x8x128xf32>
    %c0_19 = arith.constant 0 : index
    %c0_20 = arith.constant 0 : index
    %c0_21 = arith.constant 0 : index
    %45 = vector.load %arg7[%c0_19, %c0_20, %c0_21] : memref<1x8x128xf32, #tpu.memory_space<vmem>>, vector<1x8x128xf32>
    tpu.vector_store %arg7[%c0_19, %c0_20, %c0_21], %44 {strides = array<i32>} : memref<1x8x128xf32, #tpu.memory_space<vmem>>, vector<1x8x128xf32>,
    return
  }
  func.func @transform_0(%arg0: i32) -> (i32, i32, i32) {
    %c0_i32 = arith.constant 0 : i32
    %c0_i32_0 = arith.constant 0 : i32
    %c0_i32_1 = arith.constant 0 : i32
    return %arg0, %c0_i32, %c0_i32_0 : i32, i32, i32
  }
  func.func @transform_1(%arg0: i32) -> (i32, i32) {
    %c0_i32 = arith.constant 0 : i32
    %c0_i32_0 = arith.constant 0 : i32
    %c0_i32_1 = arith.constant 0 : i32
    return %c0_i32, %c0_i32_0 : i32, i32
  }
  func.func @transform_2(%arg0: i32) -> (i32, i32) {
    %c0_i32 = arith.constant 0 : i32
    %c0_i32_0 = arith.constant 0 : i32
    %c0_i32_1 = arith.constant 0 : i32
    return %c0_i32, %c0_i32_0 : i32, i32
  }
  func.func @transform_3(%arg0: i32) -> (i32, i32) {
    %c0_i32 = arith.constant 0 : i32
    %c0_i32_0 = arith.constant 0 : i32
    %c0_i32_1 = arith.constant 0 : i32
    return %c0_i32, %c0_i32_0 : i32, i32
  }
  func.func @transform_4(%arg0: i32) -> (i32, i32) {
    %c0_i32 = arith.constant 0 : i32
    %c0_i32_0 = arith.constant 0 : i32
    %c0_i32_1 = arith.constant 0 : i32
    return %c0_i32, %c0_i32_0 : i32, i32
  }
  func.func @transform_5(%arg0: i32) -> (i32, i32) {
    %c0_i32 = arith.constant 0 : i32
    %c0_i32_0 = arith.constant 0 : i32
    %c0_i32_1 = arith.constant 0 : i32
    return %c0_i32, %c0_i32_0 : i32, i32
  }
  func.func @transform_6(%arg0: i32) -> (i32, i32, i32) {
    %c0_i32 = arith.constant 0 : i32
    %c0_i32_0 = arith.constant 0 : i32
    %c0_i32_1 = arith.constant 0 : i32
    return %arg0, %c0_i32, %c0_i32_0 : i32, i32, i32
  }
}

</mosaic_0001>

<llo_original>
// kernel: tpu_custom_call.1
$region0: #{tpu_custom_call.1}
  #allocation0 [shape = 'u32[]', space=smem, size = 0x4, offset = 0x4, fixed_abs, tag = 'smem constant byte address 0x4 - core index']
  #allocation1 [shape = 'u32[144,128]{1,0:T(1,128)}', space=vmem, size = 0x12000, scoped, tag = 'internal scratch']
  %s0 = inlined_call_operand.hbm [shape: f32[2,8,32], index: 0, kind: input, shape index: {}]
  %s1 = inlined_call_operand.hbm [shape: s8[8,8], index: 1, kind: input, shape index: {}]
  %s2 = inlined_call_operand.hbm [shape: bf16[32,384], index: 2, kind: input, shape index: {}]
  %s3 = inlined_call_operand.hbm [shape: bf16[128,128], index: 3, kind: input, shape index: {}]
  %s4 = inlined_call_operand.vmem [shape: f32[1,384], index: 4, kind: input, shape index: {}]
  %s5 = inlined_call_operand.vmem [shape: f32[1,128], index: 5, kind: input, shape index: {}]
  %s6 = inlined_call_operand.hbm [shape: f32[2,8,128], index: 6, kind: output, shape index: {}]
  %s7 = sld [smem:[#allocation0]]
  $region73: #{tpu_custom_call.1} parent=0
    _
  %s9 = ssub.s32 1, %s7
  %s10 = scalar_select 0, %s9, %s7
  $region1: #{tpu_custom_call.1} parent=0
    #allocation2 [shape = 'u8[8192]{0}', space=vmem, size = 0x2000, scoped, tag = 'input window, operand 0']
    #allocation3 [shape = 's32[2]{0}', space=sflag, size = 0x8, scoped, tag = 'scoped memory for tpu_custom_call.1']
    #allocation4 [shape = 's32[2]{0}', space=sflag, size = 0x8, scoped, tag = 'scoped memory for tpu_custom_call.1']
    #allocation5 [shape = 'u8[1024]{0}', space=vmem, size = 0x400, scoped, tag = 'input window, operand 1, single buffered']
    #allocation6 [shape = 's32[1]{0}', space=sflag, size = 0x4, scoped, tag = 'scoped memory for tpu_custom_call.1']
    #allocation7 [shape = 'u8[24576]{0}', space=vmem, size = 0x6000, scoped, tag = 'input window, operand 2, single buffered']
    #allocation8 [shape = 'u8[32768]{0}', space=vmem, size = 0x8000, scoped, tag = 'input window, operand 3, single buffered']
    #allocation9 [shape = 's32[1]{0}', space=sflag, size = 0x4, scoped, tag = 'scoped memory for tpu_custom_call.1']
    #allocation10 [shape = 'u8[8192]{0}', space=vmem, size = 0x2000, scoped, tag = 'output window, operand 0']
    %11 = vsyncpa [#allocation3], 0
    %s12 = scalar_lea.sflag [#allocation3], 1
    %13 = vsyncpa %s12, 0
    %14 = vsyncpa [#allocation6], 0
    %15 = vsyncpa [#allocation9], 0
    %16 = vsyncpa [#allocation4], 0
    %s17 = scalar_lea.sflag [#allocation4], 1
    %18 = vsyncpa %s17, 0
    loop: start=0, step=1, limit=4
    $region2: #{tpu_custom_call.1} parent=1 // loop_pre_header
      _
    $region3: #{tpu_custom_call.1} parent=1 // loop_header
      %s20 = sphi 0, %s24
      %p21 = scmp.ge.s32.totalorder %s20, 4
      %s30 = sphi 0, %s32
      %s33 = sphi 0, %s30
      %s34 = sphi 0, %s33
      %s50 = sphi 0, %s34
      %s54 = sphi 0, %s54
      %s56 = sphi 0, %s54
      %s57 = sphi 0, %s56
      %s71 = sphi 0, %s57
      %s75 = sphi 0, %s75
      %s77 = sphi 0, %s75
      %s78 = sphi 0, %s77
      %s92 = sphi 0, %s78
      %s96 = sphi 0, %s96
      %s98 = sphi 0, %s96
      %s99 = sphi 0, %s98
      %s113 = sphi 0, %s99
      %s117 = sphi 0, %s117
      %s119 = sphi 0, %s117
      %s120 = sphi 0, %s119
      %s134 = sphi 0, %s120
      %s138 = sphi 0, %s138
      %s140 = sphi 0, %s138
      %s141 = sphi 0, %s140
      %s155 = sphi 0, %s141
      %s161 = sphi 0, %s163
      %s164 = sphi 0, %s161
      %s165 = sphi 0, %s164
      %s181 = sphi 0, %s165
    $region4: #{tpu_custom_call.1} parent=1 // loop_header_branch
      %23 = sbr.rel (%p21) target = $region8
    $region5: #{tpu_custom_call.1} parent=1 // loop_body
      %s25 = ssub.s32 %s20, 1
      %s26 = ssub.s32 %s20, 2
      %s27 = sadd.s32 %s20, 1
      %s28 = ssub.s32 %s20, %s27
      %p29 = scmp.eq.s32.totalorder %s28, 0
      %s31 = sadd.s32 %s30, 1
      %s32 = scalar_select %p29, %s30, %s31
      %p35 = pneg %p29
      %p36 = scmp.eq.s32.totalorder %s20, 1
      %p37 = por %p35, %p36
      %p38 = scmp.ne.s32.totalorder %s30, %s33
      %p39 = scmp.eq.s32.totalorder %s20, 0
      %p40 = por %p38, %p39
      %p41 = scmp.ne.s32.totalorder %s30, %s33
      %p42 = scmp.eq.s32.totalorder %s25, 1
      %p43 = por %p41, %p42
      %p44 = scmp.ne.s32.totalorder %s33, %s34
      %p45 = scmp.eq.s32.totalorder %s25, 0
      %p46 = por %p44, %p45
      %p47 = scmp.ne.s32.totalorder %s33, %s34
      %p48 = scmp.eq.s32.totalorder %s26, 1
      %p49 = por %p47, %p48
      %p51 = scmp.ne.s32.totalorder %s34, %s50
      %p52 = scmp.eq.s32.totalorder %s26, 0
      %p53 = por %p51, %p52
      %s55 = sadd.s32 %s54, 1
      %p58 = scmp.eq.s32.totalorder %s20, 1
      %p59 = scmp.ne.s32.totalorder %s54, %s56
      %p60 = scmp.eq.s32.totalorder %s20, 0
      %p61 = por %p59, %p60
      %p62 = scmp.ne.s32.totalorder %s54, %s56
      %p63 = scmp.eq.s32.totalorder %s25, 1
      %p64 = por %p62, %p63
      %p65 = scmp.ne.s32.totalorder %s56, %s57
      %p66 = scmp.eq.s32.totalorder %s25, 0
      %p67 = por %p65, %p66
      %p68 = scmp.ne.s32.totalorder %s56, %s57
      %p69 = scmp.eq.s32.totalorder %s26, 1
      %p70 = por %p68, %p69
      %p72 = scmp.ne.s32.totalorder %s57, %s71
      %p73 = scmp.eq.s32.totalorder %s26, 0
      %p74 = por %p72, %p73
      %s76 = sadd.s32 %s75, 1
      %p79 = scmp.eq.s32.totalorder %s20, 1
      %p80 = scmp.ne.s32.totalorder %s75, %s77
      %p81 = scmp.eq.s32.totalorder %s20, 0
      %p82 = por %p80, %p81
      %p83 = scmp.ne.s32.totalorder %s75, %s77
      %p84 = scmp.eq.s32.totalorder %s25, 1
      %p85 = por %p83, %p84
      %p86 = scmp.ne.s32.totalorder %s77, %s78
      %p87 = scmp.eq.s32.totalorder %s25, 0
      %p88 = por %p86, %p87
      %p89 = scmp.ne.s32.totalorder %s77, %s78
      %p90 = scmp.eq.s32.totalorder %s26, 1
      %p91 = por %p89, %p90
      %p93 = scmp.ne.s32.totalorder %s78, %s92
      %p94 = scmp.eq.s32.totalorder %s26, 0
      %p95 = por %p93, %p94
      %s97 = sadd.s32 %s96, 1
      %p100 = scmp.eq.s32.totalorder %s20, 1
      %p101 = scmp.ne.s32.totalorder %s96, %s98
      %p102 = scmp.eq.s32.totalorder %s20, 0
      %p103 = por %p101, %p102
      %p104 = scmp.ne.s32.totalorder %s96, %s98
      %p105 = scmp.eq.s32.totalorder %s25, 1
      %p106 = por %p104, %p105
      %p107 = scmp.ne.s32.totalorder %s98, %s99
      %p108 = scmp.eq.s32.totalorder %s25, 0
      %p109 = por %p107, %p108
      %p110 = scmp.ne.s32.totalorder %s98, %s99
      %p111 = scmp.eq.s32.totalorder %s26, 1
      %p112 = por %p110, %p111
      %p114 = scmp.ne.s32.totalorder %s99, %s113
      %p115 = scmp.eq.s32.totalorder %s26, 0
      %p116 = por %p114, %p115
      %s118 = sadd.s32 %s117, 1
      %p121 = scmp.eq.s32.totalorder %s20, 1
      %p122 = scmp.ne.s32.totalorder %s117, %s119
      %p123 = scmp.eq.s32.totalorder %s20, 0
      %p124 = por %p122, %p123
      %p125 = scmp.ne.s32.totalorder %s117, %s119
      %p126 = scmp.eq.s32.totalorder %s25, 1
      %p127 = por %p125, %p126
      %p128 = scmp.ne.s32.totalorder %s119, %s120
      %p129 = scmp.eq.s32.totalorder %s25, 0
      %p130 = por %p128, %p129
      %p131 = scmp.ne.s32.totalorder %s119, %s120
      %p132 = scmp.eq.s32.totalorder %s26, 1
      %p133 = por %p131, %p132
      %p135 = scmp.ne.s32.totalorder %s120, %s134
      %p136 = scmp.eq.s32.totalorder %s26, 0
      %p137 = por %p135, %p136
      %s139 = sadd.s32 %s138, 1
      %p142 = scmp.eq.s32.totalorder %s20, 1
      %p143 = scmp.ne.s32.totalorder %s138, %s140
      %p144 = scmp.eq.s32.totalorder %s20, 0
      %p145 = por %p143, %p144
      %p146 = scmp.ne.s32.totalorder %s138, %s140
      %p147 = scmp.eq.s32.totalorder %s25, 1
      %p148 = por %p146, %p147
      %p149 = scmp.ne.s32.totalorder %s140, %s141
      %p150 = scmp.eq.s32.totalorder %s25, 0
      %p151 = por %p149, %p150
      %p152 = scmp.ne.s32.totalorder %s140, %s141
      %p153 = scmp.eq.s32.totalorder %s26, 1
      %p154 = por %p152, %p153
      %p156 = scmp.ne.s32.totalorder %s141, %s155
      %p157 = scmp.eq.s32.totalorder %s26, 0
      %p158 = por %p156, %p157
      %s159 = ssub.s32 %s20, %s27
      %p160 = scmp.eq.s32.totalorder %s159, 0
      %s162 = sadd.s32 %s161, 1
      %s163 = scalar_select %p160, %s161, %s162
      %p166 = pneg %p160
      %p167 = scmp.eq.s32.totalorder %s20, 1
      %p168 = por %p166, %p167
      %p169 = scmp.ne.s32.totalorder %s161, %s164
      %p170 = scmp.eq.s32.totalorder %s20, 0
      %p171 = por %p169, %p170
      %p172 = scmp.ne.s32.totalorder %s161, %s164
      %p173 = scmp.eq.s32.totalorder %s25, 1
      %p174 = por %p172, %p173
      %p175 = scmp.ne.s32.totalorder %s164, %s165
      %p176 = scmp.eq.s32.totalorder %s25, 0
      %p177 = por %p175, %p176
      %p178 = scmp.ne.s32.totalorder %s164, %s165
      %p179 = scmp.eq.s32.totalorder %s26, 1
      %p180 = por %p178, %p179
      %p182 = scmp.ne.s32.totalorder %s165, %s181
      %p183 = scmp.eq.s32.totalorder %s26, 0
      %p184 = por %p182, %p183
      %p185 = scmp.le.s32.totalorder 1, %s20
      %p186 = scmp.lt.s32.totalorder %s20, 3
      %p187 = pnand %p185, %p186
      %p188 = pneg %p187
      // Predicated region
      $region9: #{tpu_custom_call.1} parent=5 // pred_check
        _
      $region10: #{tpu_custom_call.1} parent=5 // pred_check_branch
        %190 = sbr.rel (%p187) target = $region12
      $region11: #{tpu_custom_call.1} parent=5 // pred_region
        %s191 = ssub.s32 %s20, 1
        // Predicated region
        $region13: #{tpu_custom_call.1} parent=11 // pred_check
          %p192 = pneg %p67
        $region14: #{tpu_custom_call.1} parent=11 // pred_check_branch
          %194 = sbr.rel (%p192) target = $region16
        $region15: #{tpu_custom_call.1} parent=11 // pred_region
          %s196 = ssub.s32 32, 32
          %197 = vsyncadd [#allocation6], %s196
          %s199 = sshll.u32 [#allocation5], 4
          %s200 = int_to_ptr.vmem [resolvable:$true] %s199
          %202 = dma.hbm_to_vmem [thread:$0]  %s1, 32, %s200, [#allocation6]
        $region16: #{tpu_custom_call.1} parent=11 // pred_fallthru
          _
        // Predicated region
        $region17: #{tpu_custom_call.1} parent=11 // pred_check
          %p203 = pneg %p88
        $region18: #{tpu_custom_call.1} parent=11 // pred_check_branch
          %205 = sbr.rel (%p203) target = $region20
        $region19: #{tpu_custom_call.1} parent=11 // pred_region
          %s207 = ssub.s32 768, 768
          %208 = vsyncadd [#allocation6], %s207
          %s209 = sshll.u32 [#allocation7], 4
          %s210 = int_to_ptr.vmem [resolvable:$true] %s209
          %215 = dma.hbm_to_vmem [thread:$0]  %s2, 768, %s210, [#allocation6], 192, 192, 12
        $region20: #{tpu_custom_call.1} parent=11 // pred_fallthru
          _
        // Predicated region
        $region21: #{tpu_custom_call.1} parent=11 // pred_check
          %p216 = pneg %p109
        $region22: #{tpu_custom_call.1} parent=11 // pred_check_branch
          %218 = sbr.rel (%p216) target = $region24
        $region23: #{tpu_custom_call.1} parent=11 // pred_region
          %s220 = ssub.s32 1024, 1024
          %221 = vsyncadd [#allocation9], %s220
          %s222 = sshll.u32 [#allocation8], 4
          %s223 = int_to_ptr.vmem [resolvable:$true] %s222
          %228 = dma.hbm_to_vmem [thread:$0]  %s3, 1024, %s223, [#allocation9], 64, 64, 4
        $region24: #{tpu_custom_call.1} parent=11 // pred_fallthru
          _
        // Predicated region
        $region25: #{tpu_custom_call.1} parent=11 // pred_check
          %p229 = pneg %p130
        $region26: #{tpu_custom_call.1} parent=11 // pred_check_branch
          %231 = sbr.rel (%p229) target = $region28
        $region27: #{tpu_custom_call.1} parent=11 // pred_region
          _
        $region28: #{tpu_custom_call.1} parent=11 // pred_fallthru
          _
        // Predicated region
        $region29: #{tpu_custom_call.1} parent=11 // pred_check
          %p232 = pneg %p151
        $region30: #{tpu_custom_call.1} parent=11 // pred_check_branch
          %234 = sbr.rel (%p232) target = $region32
        $region31: #{tpu_custom_call.1} parent=11 // pred_region
          _
        $region32: #{tpu_custom_call.1} parent=11 // pred_fallthru
          _
      $region12: #{tpu_custom_call.1} parent=5 // pred_fallthru
        _
      %p235 = scmp.lt.s32.totalorder %s20, 2
      // Predicated region
      $region33: #{tpu_custom_call.1} parent=5 // pred_check
        %p236 = pneg %p235
      $region34: #{tpu_custom_call.1} parent=5 // pred_check_branch
        %238 = sbr.rel (%p236) target = $region36
      $region35: #{tpu_custom_call.1} parent=5 // pred_region
        // Predicated region
        $region37: #{tpu_custom_call.1} parent=35 // pred_check
          %p239 = pneg %p40
        $region38: #{tpu_custom_call.1} parent=35 // pred_check_branch
          %241 = sbr.rel (%p239) target = $region40
        $region39: #{tpu_custom_call.1} parent=35 // pred_region
          %s242 = sand.u32 %s30, 1
          %s243 = scalar_lea.sflag [#allocation3], %s242
          %s244 = sand.u32 %s30, 1
          %s245 = smul.addr %s244, 8
          %s246 = scalar_lea.vmem [#allocation2], %s245
          %s248 = ssub.s32 128, 128
          %249 = vsyncadd %s243, %s248
          %s250 = smul.addr %s20, 128
          %s251 = scalar_lea.hbm %s0, %s250
          %s253 = sshll.u32 %s246, 4
          %s254 = int_to_ptr.vmem [resolvable:$true] %s253
          %256 = dma.hbm_to_vmem [thread:$0]  %s251, 128, %s254, %s243
        $region40: #{tpu_custom_call.1} parent=35 // pred_fallthru
          _
      $region36: #{tpu_custom_call.1} parent=5 // pred_fallthru
        _
      %p257 = scmp.le.s32.totalorder 1, %s20
      %p258 = scmp.lt.s32.totalorder %s20, 3
      %p259 = pnand %p257, %p258
      %p260 = pneg %p259
      // Predicated region
      $region41: #{tpu_custom_call.1} parent=5 // pred_check
        _
      $region42: #{tpu_custom_call.1} parent=5 // pred_check_branch
        %262 = sbr.rel (%p259) target = $region44
      $region43: #{tpu_custom_call.1} parent=5 // pred_region
        %s263 = ssub.s32 %s20, 1
        %s264 = sand.u32 %s33, 1
        %s265 = scalar_lea.sflag [#allocation3], %s264
        %s266 = sand.u32 %s33, 1
        %s267 = smul.addr %s266, 8
        %s268 = scalar_lea.vmem [#allocation2], %s267
        // Predicated region
        $region45: #{tpu_custom_call.1} parent=43 // pred_check
          %p269 = pneg %p46
        $region46: #{tpu_custom_call.1} parent=43 // pred_check_branch
          %271 = sbr.rel (%p269) target = $region48
        $region47: #{tpu_custom_call.1} parent=43 // pred_region
          %272 = dma.done %s265, 128
        $region48: #{tpu_custom_call.1} parent=43 // pred_fallthru
          _
        // Predicated region
        $region49: #{tpu_custom_call.1} parent=43 // pred_check
          %p273 = pneg %p67
        $region50: #{tpu_custom_call.1} parent=43 // pred_check_branch
          %275 = sbr.rel (%p273) target = $region52
        $region51: #{tpu_custom_call.1} parent=43 // pred_region
          %276 = dma.done [#allocation6], 32
        $region52: #{tpu_custom_call.1} parent=43 // pred_fallthru
          _
        // Predicated region
        $region53: #{tpu_custom_call.1} parent=43 // pred_check
          %p277 = pneg %p88
        $region54: #{tpu_custom_call.1} parent=43 // pred_check_branch
          %279 = sbr.rel (%p277) target = $region56
        $region55: #{tpu_custom_call.1} parent=43 // pred_region
          %280 = dma.done [#allocation6], 768
        $region56: #{tpu_custom_call.1} parent=43 // pred_fallthru
          _
        // Predicated region
        $region57: #{tpu_custom_call.1} parent=43 // pred_check
          %p281 = pneg %p109
        $region58: #{tpu_custom_call.1} parent=43 // pred_check_branch
          %283 = sbr.rel (%p281) target = $region60
        $region59: #{tpu_custom_call.1} parent=43 // pred_region
          %284 = dma.done [#allocation9], 1024
        $region60: #{tpu_custom_call.1} parent=43 // pred_fallthru
          _
        %s285 = sand.u32 %s33, 1
        %s286 = scalar_lea.sflag [#allocation3], %s285
        %s287 = sand.u32 %s33, 1
        %s288 = smul.addr %s287, 8
        %s289 = scalar_lea.vmem [#allocation2], %s288
        %p290 = pneg %p46
        %p291 = pneg %p43
        %p292 = pneg %p67
        %p293 = pneg %p64
        %p294 = pneg %p88
        %p295 = pneg %p85
        %p296 = pneg %p109
        %p297 = pneg %p106
        %p298 = pneg %p130
        %p299 = pneg %p127
        %p300 = pneg %p151
        %p301 = pneg %p148
        %p302 = pneg %p177
        %p303 = pneg %p174
        %s304 = sand.u32 %s164, 1
        %s305 = scalar_lea.sflag [#allocation4], %s304
        %s306 = sand.u32 %s164, 1
        %s307 = smul.addr %s306, 8
        %s308 = scalar_lea.vmem [#allocation10], %s307
        %v312 = vld [vmem:[%s268] sm:$0xff]
        %v313 = vpack.c.bf16 %v312, %v312
        %v314 = vld [vmem:[#allocation7] sm:$0xff]
        %v315 = vld [vmem:[#allocation7 + $0x8] sm:$0xf]
        %v316 = vld [vmem:[#allocation7 + $0xc] sm:$0xff]
        %v317 = vld [vmem:[#allocation7 + $0x14] sm:$0xf]
        %v318 = vld [vmem:[#allocation7 + $0x18] sm:$0xff]
        %v319 = vld [vmem:[#allocation7 + $0x20] sm:$0xf]
        %v320 = vld [vmem:[#allocation7 + $0x24] sm:$0xff]
        %v321 = vld [vmem:[#allocation7 + $0x2c] sm:$0xf]
        %v322 = vld [vmem:[%s4] sm:$0x7]
        %v324 = vlaneseq
        %v325 = vshrl.u32 %v324, 7
        %v326 = vsub.s32 0, %v325
        %v327 = vrot.slane %v322, %v326
        %v328 = vlaneseq
        %v329 = vshrl.u32 %v328, 7
        %v330 = vsub.s32 1, %v329
        %v331 = vrot.slane %v322, %v330
        %v332 = vlaneseq
        %v333 = vshrl.u32 %v332, 7
        %v334 = vsub.s32 2, %v333
        %v335 = vrot.slane %v322, %v334
        %v347 = vunpack.c.l.b16 %v314
        %v348 = vunpack.c.h.b16 %v314
        %v349 = vunpack.c.l.b16 %v315
        %v350 = vunpack.c.l.b16 %v316
        %v351 = vunpack.c.h.b16 %v316
        %v352 = vunpack.c.l.b16 %v317
        %v353 = vunpack.c.l.b16 %v318
        %v354 = vunpack.c.h.b16 %v318
        %v355 = vunpack.c.l.b16 %v319
        %v356 = vunpack.c.l.b16 %v320
        %v357 = vunpack.c.h.b16 %v320
        %v358 = vunpack.c.l.b16 %v321
        %v359 = vpack.c.b16 %v350, %v347
        %v360 = vpack.c.b16 %v351, %v348
        %v361 = vpack.c.b16 %v352, %v349
        %v362 = vpack.c.b16 %v356, %v353
        %v363 = vpack.c.b16 %v357, %v354
        %v364 = vpack.c.b16 %v358, %v355
        %vm371 = vcmask 261120
        %v373 = vsel %vm371, %v313, 0
        %375 = vmatprep.subr.bf16.mxu0 0
        %376 = vmatpush1.bf16.msra.mxu0 0
        %377 = vmatprep.subr.bf16.mxu0 0
        %378 = vmatpush1.bf16.msra.mxu0 0
        %379 = vmatprep.subr.bf16.mxu0 0
        %380 = vmatpush1.bf16.msra.mxu0 0
        %381 = vmatprep.subr.bf16.mxu0 0
        %382 = vmatpush1.bf16.msra.mxu0 0
        %383 = vmatprep.subr.bf16.mxu0 0
        %384 = vmatpush1.bf16.msra.mxu0 0
        %385 = vmatprep.subr.bf16.mxu0 0
        %386 = vmatpush1.bf16.msra.mxu0 0
        %387 = vmatprep.subr.bf16.mxu0 %v363
        %388 = vmatpush1.bf16.msra.mxu0 %v362
        %389 = vmatprep.subr.bf16.mxu0 %v360
        %390 = vmatpush1.bf16.msra.mxu0 %v359
        %391 = vmatprep.subr.bf16.mxu0 0
        %392 = vmatpush2.bf16.msra.mxu0 0
        %393 = vmatprep.subr.bf16.mxu0 0
        %394 = vmatpush2.bf16.msra.mxu0 0
        %395 = vmatprep.subr.bf16.mxu0 0
        %396 = vmatpush2.bf16.msra.mxu0 0
        %397 = vmatprep.subr.bf16.mxu0 0
        %398 = vmatpush2.bf16.msra.mxu0 0
        %399 = vmatprep.subr.bf16.mxu0 0
        %400 = vmatpush2.bf16.msra.mxu0 0
        %401 = vmatprep.subr.bf16.mxu0 0
        %402 = vmatpush2.bf16.msra.mxu0 0
        %403 = vmatprep.subr.bf16.mxu0 0
        %404 = vmatpush2.bf16.msra.mxu0 0
        %405 = vmatprep.subr.bf16.mxu0 0
        %406 = vmatpush2.bf16.msra.mxu0 0
        %407 = vmatprep.mubr.bf16.mxu0 0
        %408 = vmatmul.mubr.bf16.gmra.mxu0 %v373
        %v409 = vpop.f32.mrf.mxu0
        %v410 = vadd.f32 %v327, %v409
        %v411 = vpop.f32.mrf.mxu0
        %v412 = vadd.f32 %v331, %v411
        %v413 = vpop.f32.mrf.mxu0
        %v414 = vpop.f32.mrf.mxu0
        %415 = vdwg.mxu0
        %416 = vmatprep.subr.bf16.mxu0 0
        %417 = vmatpush1.bf16.msra.mxu0 0
        %418 = vmatprep.subr.bf16.mxu0 0
        %419 = vmatpush1.bf16.msra.mxu0 0
        %420 = vmatprep.subr.bf16.mxu0 0
        %421 = vmatpush1.bf16.msra.mxu0 0
        %422 = vmatprep.subr.bf16.mxu0 0
        %423 = vmatpush1.bf16.msra.mxu0 0
        %424 = vmatprep.subr.bf16.mxu0 0
        %425 = vmatpush1.bf16.msra.mxu0 0
        %426 = vmatprep.subr.bf16.mxu0 0
        %427 = vmatpush1.bf16.msra.mxu0 0
        %428 = vmatprep.subr.bf16.mxu0 0
        %429 = vmatpush1.bf16.msra.mxu0 %v364
        %430 = vmatprep.subr.bf16.mxu0 0
        %431 = vmatpush1.bf16.msra.mxu0 %v361
        %432 = vmatprep.subr.bf16.mxu0 0
        %433 = vmatpush2.bf16.msra.mxu0 0
        %434 = vmatprep.subr.bf16.mxu0 0
        %435 = vmatpush2.bf16.msra.mxu0 0
        %436 = vmatprep.subr.bf16.mxu0 0
        %437 = vmatpush2.bf16.msra.mxu0 0
        %438 = vmatprep.subr.bf16.mxu0 0
        %439 = vmatpush2.bf16.msra.mxu0 0
        %440 = vmatprep.subr.bf16.mxu0 0
        %441 = vmatpush2.bf16.msra.mxu0 0
        %442 = vmatprep.subr.bf16.mxu0 0
        %443 = vmatpush2.bf16.msra.mxu0 0
        %444 = vmatprep.subr.bf16.mxu0 0
        %445 = vmatpush2.bf16.msra.mxu0 0
        %446 = vmatprep.subr.bf16.mxu0 0
        %447 = vmatpush2.bf16.msra.mxu0 0
        %448 = vmatprep.mubr.bf16.mxu0 0
        %449 = vmatmul.mubr.bf16.gmra.mxu0 %v373
        %v450 = vpop.f32.mrf.mxu0
        %v451 = vadd.f32 %v335, %v450
        %v452 = vpop.f32.mrf.mxu0
        %v453 = vpop.f32.mrf.mxu0
        %v454 = vpop.f32.mrf.mxu0
        %455 = vdwg.mxu0
        %v456 = vpack.c.bf16 %v410, %v410
        %v457 = vpack.c.bf16 %v412, %v412
        %v458 = vpack.c.bf16 %v451, %v451
        %459 = vmatprep.subr.bf16.mxu0 0
        %460 = vmatpush1.bf16.xpose.msra.mxu0 0
        %461 = vmatprep.subr.bf16.mxu0 0
        %462 = vmatpush1.bf16.xpose.msra.mxu0 0
        %463 = vmatprep.subr.bf16.mxu0 0
        %464 = vmatpush1.bf16.xpose.msra.mxu0 0
        %465 = vmatprep.subr.bf16.mxu0 0
        %466 = vmatpush1.bf16.xpose.msra.mxu0 0
        %467 = vmatprep.subr.bf16.mxu0 0
        %468 = vmatpush1.bf16.xpose.msra.mxu0 0
        %469 = vmatprep.subr.bf16.mxu0 0
        %470 = vmatpush1.bf16.xpose.msra.mxu0 0
        %471 = vmatprep.subr.bf16.mxu0 0
        %472 = vmatpush1.bf16.xpose.msra.mxu0 0
        %473 = vmatprep.subr.bf16.mxu0 0
        %474 = vmatpush1.bf16.xpose.msra.mxu0 %v457
        %475 = vmatprep.subr.bf16.mxu0 0
        %476 = vmatpush2.bf16.xpose.msra.mxu0 0
        %477 = vmatprep.subr.bf16.mxu0 0
        %478 = vmatpush2.bf16.xpose.msra.mxu0 0
        %479 = vmatprep.subr.bf16.mxu0 0
        %480 = vmatpush2.bf16.xpose.msra.mxu0 0
        %481 = vmatprep.subr.bf16.mxu0 0
        %482 = vmatpush2.bf16.xpose.msra.mxu0 0
        %483 = vmatprep.subr.bf16.mxu0 0
        %484 = vmatpush2.bf16.xpose.msra.mxu0 0
        %485 = vmatprep.subr.bf16.mxu0 0
        %486 = vmatpush2.bf16.xpose.msra.mxu0 0
        %487 = vmatprep.subr.bf16.mxu0 0
        %488 = vmatpush2.bf16.xpose.msra.mxu0 0
        %489 = vmatprep.subr.bf16.mxu0 0
        %490 = vmatpush2.bf16.xpose.msra.mxu0 0
        %491 = vmatprep.mubr.bf16.mxu0 0
        %492 = vmatmul.mubr.bf16.gmra.mxu0 %v456
        %v493 = vpop.f32.mrf.mxu0
        %v494 = vadd.f32 0.0, %v493
        %v495 = vpop.f32.mrf.mxu0
        %v496 = vpop.f32.mrf.mxu0
        %v497 = vpop.f32.mrf.mxu0
        %498 = vdwg.mxu0
        %v499 = vld [vmem:[#allocation5] sm:$0x3]
        %vm500 = vnez %v499
        %v501 = vsel %vm500, 16843009, 0
        %v502 = vunpack.c.0.s8 %v501
        %vm503 = vcmp.ne.s32.totalorder %v502, 0
        %v504 = vsel %vm503, %v494, -1e+30
        %vm505 = vcmask 64512
        %v506 = vsel %vm505, %v504, -inf
        %507 = vmax.xlane.f32.xlu0 %v506
        %v508 = vpop.xlane.xlu0 %507
        %v509 = vsub.f32 %v504, %v508
        %v510 = vmul.f32 %v509, 1.442695
        %v511 = vpow.pop %v510
        %v512 = vsel %vm505, %v511, 0.0
        %513 = vadd.xlane.f32.xlu0 %v512
        %v514 = vpop.xlane.xlu0 %513
        %v515 = vpack.c.bf16 %v511, %v511
        %v517 = vsel %vm505, %v515, 0
        %vm519 = vcmask 1043456
        %v521 = vsel %vm519, %v458, 0
        %523 = vmatprep.subr.bf16.mxu0 0
        %524 = vmatpush1.bf16.msra.mxu0 0
        %525 = vmatprep.subr.bf16.mxu0 0
        %526 = vmatpush1.bf16.msra.mxu0 0
        %527 = vmatprep.subr.bf16.mxu0 0
        %528 = vmatpush1.bf16.msra.mxu0 0
        %529 = vmatprep.subr.bf16.mxu0 0
        %530 = vmatpush1.bf16.msra.mxu0 0
        %531 = vmatprep.subr.bf16.mxu0 0
        %532 = vmatpush1.bf16.msra.mxu0 0
        %533 = vmatprep.subr.bf16.mxu0 0
        %534 = vmatpush1.bf16.msra.mxu0 0
        %535 = vmatprep.subr.bf16.mxu0 0
        %536 = vmatpush1.bf16.msra.mxu0 0
        %537 = vmatprep.subr.bf16.mxu0 0
        %538 = vmatpush1.bf16.msra.mxu0 %v521
        %539 = vmatprep.subr.bf16.mxu0 0
        %540 = vmatpush2.bf16.msra.mxu0 0
        %541 = vmatprep.subr.bf16.mxu0 0
        %542 = vmatpush2.bf16.msra.mxu0 0
        %543 = vmatprep.subr.bf16.mxu0 0
        %544 = vmatpush2.bf16.msra.mxu0 0
        %545 = vmatprep.subr.bf16.mxu0 0
        %546 = vmatpush2.bf16.msra.mxu0 0
        %547 = vmatprep.subr.bf16.mxu0 0
        %548 = vmatpush2.bf16.msra.mxu0 0
        %549 = vmatprep.subr.bf16.mxu0 0
        %550 = vmatpush2.bf16.msra.mxu0 0
        %551 = vmatprep.subr.bf16.mxu0 0
        %552 = vmatpush2.bf16.msra.mxu0 0
        %553 = vmatprep.subr.bf16.mxu0 0
        %554 = vmatpush2.bf16.msra.mxu0 0
        %555 = vmatprep.mubr.bf16.mxu0 0
        %556 = vmatmul.mubr.bf16.gmra.mxu0 %v517
        %v557 = vpop.f32.mrf.mxu0
        %v558 = vadd.f32 0.0, %v557
        %v559 = vpop.f32.mrf.mxu0
        %v560 = vpop.f32.mrf.mxu0
        %v561 = vpop.f32.mrf.mxu0
        %562 = vdwg.mxu0
        %v563 = vrcp.pop %v514
        %v564 = vmul.f32 1.0, %v563
        %v565 = vmul.f32 %v558, %v564
        %v566 = vpack.c.bf16 %v565, %v565
        %v567 = vld [vmem:[#allocation8] sm:$0xf]
        %v568 = vld [vmem:[#allocation8 + $0x4] sm:$0xf]
        %v569 = vld [vmem:[#allocation8 + $0x8] sm:$0xf]
        %v570 = vld [vmem:[#allocation8 + $0xc] sm:$0xf]
        %v571 = vld [vmem:[#allocation8 + $0x10] sm:$0xf]
        %v572 = vld [vmem:[#allocation8 + $0x14] sm:$0xf]
        %v573 = vld [vmem:[#allocation8 + $0x18] sm:$0xf]
        %v574 = vld [vmem:[#allocation8 + $0x1c] sm:$0xf]
        %v575 = vld [vmem:[#allocation8 + $0x20] sm:$0xf]
        %v576 = vld [vmem:[#allocation8 + $0x24] sm:$0xf]
        %v577 = vld [vmem:[#allocation8 + $0x28] sm:$0xf]
        %v578 = vld [vmem:[#allocation8 + $0x2c] sm:$0xf]
        %v579 = vld [vmem:[#allocation8 + $0x30] sm:$0xf]
        %v580 = vld [vmem:[#allocation8 + $0x34] sm:$0xf]
        %v581 = vld [vmem:[#allocation8 + $0x38] sm:$0xf]
        %v582 = vld [vmem:[#allocation8 + $0x3c] sm:$0xf]
        %v583 = vld [vmem:[%s5] sm:$0x1]
        %v585 = vlaneseq
        %v586 = vshrl.u32 %v585, 7
        %v587 = vsub.s32 0, %v586
        %v588 = vrot.slane %v583, %v587
        %v606 = vunpack.c.l.b16 %v567
        %v607 = vunpack.c.l.b16 %v568
        %v608 = vunpack.c.l.b16 %v569
        %v609 = vunpack.c.l.b16 %v570
        %v610 = vunpack.c.l.b16 %v571
        %v611 = vunpack.c.l.b16 %v572
        %v612 = vunpack.c.l.b16 %v573
        %v613 = vunpack.c.l.b16 %v574
        %v614 = vunpack.c.l.b16 %v575
        %v615 = vunpack.c.l.b16 %v576
        %v616 = vunpack.c.l.b16 %v577
        %v617 = vunpack.c.l.b16 %v578
        %v618 = vunpack.c.l.b16 %v579
        %v619 = vunpack.c.l.b16 %v580
        %v620 = vunpack.c.l.b16 %v581
        %v621 = vunpack.c.l.b16 %v582
        %v622 = vpack.c.b16 %v607, %v606
        %v623 = vpack.c.b16 %v609, %v608
        %v624 = vpack.c.b16 %v611, %v610
        %v625 = vpack.c.b16 %v613, %v612
        %v626 = vpack.c.b16 %v615, %v614
        %v627 = vpack.c.b16 %v617, %v616
        %v628 = vpack.c.b16 %v619, %v618
        %v629 = vpack.c.b16 %v621, %v620
        %638 = vmatprep.subr.bf16.mxu0 0
        %639 = vmatpush1.bf16.msra.mxu0 %v629
        %640 = vmatprep.subr.bf16.mxu0 0
        %641 = vmatpush1.bf16.msra.mxu0 %v628
        %642 = vmatprep.subr.bf16.mxu0 0
        %643 = vmatpush1.bf16.msra.mxu0 %v627
        %644 = vmatprep.subr.bf16.mxu0 0
        %645 = vmatpush1.bf16.msra.mxu0 %v626
        %646 = vmatprep.subr.bf16.mxu0 0
        %647 = vmatpush1.bf16.msra.mxu0 %v625
        %648 = vmatprep.subr.bf16.mxu0 0
        %649 = vmatpush1.bf16.msra.mxu0 %v624
        %650 = vmatprep.subr.bf16.mxu0 0
        %651 = vmatpush1.bf16.msra.mxu0 %v623
        %652 = vmatprep.subr.bf16.mxu0 0
        %653 = vmatpush1.bf16.msra.mxu0 %v622
        %654 = vmatprep.subr.bf16.mxu0 0
        %655 = vmatpush2.bf16.msra.mxu0 0
        %656 = vmatprep.subr.bf16.mxu0 0
        %657 = vmatpush2.bf16.msra.mxu0 0
        %658 = vmatprep.subr.bf16.mxu0 0
        %659 = vmatpush2.bf16.msra.mxu0 0
        %660 = vmatprep.subr.bf16.mxu0 0
        %661 = vmatpush2.bf16.msra.mxu0 0
        %662 = vmatprep.subr.bf16.mxu0 0
        %663 = vmatpush2.bf16.msra.mxu0 0
        %664 = vmatprep.subr.bf16.mxu0 0
        %665 = vmatpush2.bf16.msra.mxu0 0
        %666 = vmatprep.subr.bf16.mxu0 0
        %667 = vmatpush2.bf16.msra.mxu0 0
        %668 = vmatprep.subr.bf16.mxu0 0
        %669 = vmatpush2.bf16.msra.mxu0 0
        %670 = vmatprep.mubr.bf16.mxu0 0
        %671 = vmatmul.mubr.bf16.gmra.mxu0 %v566
        %v672 = vpop.f32.mrf.mxu0
        %v673 = vadd.f32 %v588, %v672
        %v674 = vpop.f32.mrf.mxu0
        %v675 = vpop.f32.mrf.mxu0
        %v676 = vpop.f32.mrf.mxu0
        %677 = vdwg.mxu0
        %678 = vst [vmem:[%s308] sm:$0xff] %v673
        %s679 = sand.u32 %s164, 1
        %s680 = scalar_lea.sflag [#allocation4], %s679
        %s681 = sand.u32 %s164, 1
        %s682 = smul.addr %s681, 8
        %s683 = scalar_lea.vmem [#allocation10], %s682
        // Predicated region
        $region61: #{tpu_custom_call.1} parent=43 // pred_check
          %p684 = pneg %p174
        $region62: #{tpu_custom_call.1} parent=43 // pred_check_branch
          %686 = sbr.rel (%p684) target = $region64
        $region63: #{tpu_custom_call.1} parent=43 // pred_region
          %s688 = ssub.s32 128, 128
          %689 = vsyncadd %s680, %s688
          %s690 = smul.addr %s25, 128
          %s691 = scalar_lea.hbm %s6, %s690
          %s693 = sshll.u32 %s683, 4
          %s694 = int_to_ptr.vmem [resolvable:$true] %s693
          %696 = dma.vmem_to_hbm [thread:$0]  %s694, 128, %s691, %s680
        $region64: #{tpu_custom_call.1} parent=43 // pred_fallthru
          _
      $region44: #{tpu_custom_call.1} parent=5 // pred_fallthru
        _
      %p697 = scmp.le.s32.totalorder 2, %s20
      // Predicated region
      $region65: #{tpu_custom_call.1} parent=5 // pred_check
        %p698 = pneg %p697
      $region66: #{tpu_custom_call.1} parent=5 // pred_check_branch
        %700 = sbr.rel (%p698) target = $region68
      $region67: #{tpu_custom_call.1} parent=5 // pred_region
        %s701 = ssub.s32 %s20, 2
        // Predicated region
        $region69: #{tpu_custom_call.1} parent=67 // pred_check
          %p702 = pneg %p180
        $region70: #{tpu_custom_call.1} parent=67 // pred_check_branch
          %704 = sbr.rel (%p702) target = $region72
        $region71: #{tpu_custom_call.1} parent=67 // pred_region
          %s705 = sand.u32 %s165, 1
          %s706 = scalar_lea.sflag [#allocation4], %s705
          %s707 = sand.u32 %s165, 1
          %s708 = smul.addr %s707, 8
          %s709 = scalar_lea.vmem [#allocation10], %s708
          %710 = dma.done %s706, 128
        $region72: #{tpu_custom_call.1} parent=67 // pred_fallthru
          _
      $region68: #{tpu_custom_call.1} parent=5 // pred_fallthru
        _
    $region6: #{tpu_custom_call.1} parent=1 // loop_footer
      %s24 = sadd.s32 1, %s20
    $region7: #{tpu_custom_call.1} parent=1 // loop_footer_branch
      %19 = sbr.rel target = $region3
    $region8: #{tpu_custom_call.1} parent=1 // loop_exit
      _
    %711 = vsyncpa [#allocation3], 1
    %s712 = scalar_lea.sflag [#allocation3], 1
    %713 = vsyncpa %s712, 1
    %714 = vsyncpa [#allocation6], 1
    %715 = vsyncpa [#allocation9], 1
    %716 = vsyncpa [#allocation4], 1
    %s717 = scalar_lea.sflag [#allocation4], 1
    %718 = vsyncpa %s717, 1

</llo_original>
